<compile_context>
chip_gen: v7x
topology: tpu7x:2x2x1
jax: 0.10.0
libtpu: 0.0.40
codegen_flags: <defaults>
</compile_context>

<pallas_src>
import jax
import jax.numpy as jnp
from jax.experimental import pallas as pl
from jax.experimental.pallas import tpu as pltpu

_LANE = 128
_SUBLANE = 8
_PIX_BLOCK = _LANE * _SUBLANE  # 1024 pixels: minimum lane-dense, full-sublane tile


def mynet_kernel(c_ref, event_ref, img_ref, out_ref):
    # c_ref:     SMEM (1,) f32        learned scalar parameter
    # event_ref: VMEM (12, TR, 128)   one (batch, pixel-tile) slab of events
    # img_ref:   VMEM (TR, 128)
    # out_ref:   VMEM (TR, 128)
    c = c_ref[0]
    neg_c = -c

    def ch(j):
        # Per-channel read (no 12-plane temporary); upcast so bf16 HBM storage
        # still computes in f32 (mandatory on v5e: no bf16 VPU/EUP).
        return event_ref[j].astype(jnp.float32)

    # --- suffix chain: j = 5..0, S_j = sum(event[j:6]); term = exp(-c * S_j) ---
    s = ch(5)
    acc_sfx = jnp.exp(neg_c * s)
    for j in range(4, -1, -1):
        s = s + ch(j)
        acc_sfx = acc_sfx + jnp.exp(neg_c * s)

    # --- prefix chain: j = 6..11, T_j = sum(event[6:j+1]); term = exp(+c * T_j) ---
    t = ch(6)
    acc_pfx = jnp.exp(c * t)
    for j in range(7, 12):
        t = t + ch(j)
        acc_pfx = acc_pfx + jnp.exp(c * t)

    acc = acc_sfx + acc_pfx                     # sum of the 12 exp terms
    img = img_ref[...].astype(jnp.float32)

    # img / (acc / 12) == img * 12 * (1/acc); approx=True keeps the reciprocal
    # on the EUP vrcp slot next to the 12 exps (kernel is HBM-bound anyway).
    out_ref[...] = (img * (12.0 * pl.reciprocal(acc, approx=True))).astype(out_ref.dtype)


def _vmem_profile():
    """Returns (target event-tile bytes, scoped-VMEM-limit cap) per generation."""
    try:
        cap = int(pltpu.get_tpu_info().vmem_capacity_bytes)
    except Exception:
        cap = 64 << 20                      # conservative: assume v7x (64 MiB / TC)
    if cap >= (128 << 20):                  # v5e / v6e: 128 MiB physical
        return 14 << 20, 64 << 20
    return 7 << 20, 48 << 20                # v7x: leave headroom below 64 MiB physical


def _pick_tile_rows(R, B, ev_itemsize, target_event_bytes, min_steps=8):
    """Rows (of 128 lanes) per tile: largest multiple of 8 whose 12-plane event
    tile fits the byte target, while keeping ~min_steps total grid steps for
    pipeline depth and v7x dual-TC load balance."""
    max_tr = (target_event_bytes // (12 * _LANE * ev_itemsize)) // _SUBLANE * _SUBLANE
    max_tr = max(_SUBLANE, min(max_tr, R))
    want_tiles = max(1, -(-min_steps // B))                      # ceil(min_steps / B)
    tr_for_steps = max(_SUBLANE, (R // want_tiles) // _SUBLANE * _SUBLANE)
    return max(_SUBLANE, min(max_tr, tr_for_steps))


def mynet_forward(c, event, img, *, tile_rows=None):
    B, C, H, W = event.shape
    assert C == 12, "mynet expects 12 event channels"
    assert img.shape == (B, 1, H, W)

    ev_isz = jnp.dtype(event.dtype).itemsize
    img_isz = jnp.dtype(img.dtype).itemsize
    out_dtype = img.dtype
    out_isz = jnp.dtype(out_dtype).itemsize

    # Flatten (H, W) into a lane-dense (R, 128) pixel grid; pad the flat pixel
    # axis up to a multiple of 8*128 only when needed (padding discarded below).
    P = H * W
    P_pad = pl.cdiv(P, _PIX_BLOCK) * _PIX_BLOCK
    ev2 = event.reshape(B, 12, P)
    im2 = img.reshape(B, P)
    if P_pad != P:
        ev2 = jnp.pad(ev2, ((0, 0), (0, 0), (0, P_pad - P)))
        im2 = jnp.pad(im2, ((0, 0), (0, P_pad - P)))
    R = P_pad // _LANE                          # always a multiple of 8
    ev2 = ev2.reshape(B, 12, R, _LANE)
    im2 = im2.reshape(B, R, _LANE)

    target_event_bytes, vmem_cap = _vmem_profile()
    TR = tile_rows if tile_rows is not None else _pick_tile_rows(
        R, B, ev_isz, target_event_bytes)
    assert TR % _SUBLANE == 0, "tile_rows must be a multiple of 8"
    n_tiles = pl.cdiv(R, TR)

    ev_spec = pl.BlockSpec((pl.Squeezed(), 12, TR, _LANE), lambda b, t: (b, 0, t, 0))
    img_spec = pl.BlockSpec((pl.Squeezed(), TR, _LANE), lambda b, t: (b, t, 0))
    out_spec = pl.BlockSpec((pl.Squeezed(), TR, _LANE), lambda b, t: (b, t, 0))

    grid_spec = pltpu.PrefetchScalarGridSpec(
        num_scalar_prefetch=0,
        grid=(B, n_tiles),
        in_specs=[
            pl.BlockSpec(memory_space=pltpu.SMEM),   # c (scalar parameter)
            ev_spec,                                 # event pixel tile
            img_spec,                                # img pixel tile
        ],
        out_specs=out_spec,
    )

    # Double-buffered in/out tiles + f32 elementwise temporaries Mosaic
    # materializes (s/t/acc chains), with 25% headroom; clamped per chip.
    tile_px = TR * _LANE
    buf_bytes = tile_px * (12 * ev_isz + img_isz + out_isz)
    work_bytes = 2 * buf_bytes + 8 * tile_px * 4
    vmem_limit = int(min(vmem_cap, max(16 << 20, int(work_bytes * 1.25))))

    npix = B * H * W
    cost = pl.CostEstimate(
        flops=26 * npix,                                   # adds + muls per pixel
        transcendentals=13 * npix,                         # 12 exps + 1 reciprocal
        bytes_accessed=npix * (12 * ev_isz + img_isz + out_isz),
    )

    out = pl.pallas_call(
        mynet_kernel,
        out_shape=jax.ShapeDtypeStruct((B, R, _LANE), out_dtype),
        grid_spec=grid_spec,
        compiler_params=pltpu.CompilerParams(
            dimension_semantics=("parallel", "parallel"),
            vmem_limit_bytes=vmem_limit,
        ),
        cost_estimate=cost,
    )(c, ev2, im2)

    return out.reshape(B, P_pad)[:, :P].reshape(B, 1, H, W)


def mynet_reference(c, event, img):
    """Pure-JAX mirror of the PyTorch forward, for validation."""
    c = c[0]
    event = event.astype(jnp.float32)
    img = img.astype(jnp.float32)
    terms = []
    for j in range(12):
        if j <= 5:
            terms.append(jnp.exp(c * -event[:, j:6, ...].sum(axis=1)))
        else:
            terms.append(jnp.exp(c * event[:, 6:j + 1, ...].sum(axis=1)))
    E = jnp.stack(terms, axis=1).sum(axis=1)[:, None, ...] / 12.0
    return img / E


if __name__ == "__main__":
    key = jax.random.PRNGKey(0)
    k_ev, k_img, k_ev2, k_img2 = jax.random.split(key, 4)

    # Case 1: lane-aligned shapes; default tiling gives a multi-step grid.
    B, C, H, W = 2, 12, 16, 128
    event = jax.random.uniform(k_ev, (B, C, H, W), dtype=jnp.float32)
    img = jax.random.uniform(k_img, (B, 1, H, W), dtype=jnp.float32) + 0.5

    # Parameter c is a scalar; nn.Parameter(torch.tensor(0.0)) -> init value 0.0.
    c0 = jnp.array([0.0], dtype=jnp.float32)
    c1 = jnp.array([0.1], dtype=jnp.float32)

    # Tolerances relaxed vs. exact divide because of the approx EUP reciprocal.
    out = mynet_forward(c0, event, img)
    jax.block_until_ready(out)
    assert out.shape == (B, 1, H, W)
    assert jnp.allclose(out, mynet_reference(c0, event, img), atol=5e-3, rtol=5e-3)

    out = mynet_forward(c1, event, img)
    jax.block_until_ready(out)
    assert jnp.allclose(out, mynet_reference(c1, event, img), atol=5e-3, rtol=5e-3)

    # Explicit single-tile override exercises the tile_rows path.
    out = mynet_forward(c1, event, img, tile_rows=16)
    jax.block_until_ready(out)
    assert jnp.allclose(out, mynet_reference(c1, event, img), atol=5e-3, rtol=5e-3)

    # Case 2: W not a multiple of 128 (H*W not a multiple of 1024) exercises the
    # flatten + pad path that keeps loads/stores lane-dense for odd image sizes.
    H2, W2 = 10, 96
    event2 = jax.random.uniform(k_ev2, (B, C, H2, W2), dtype=jnp.float32)
    img2 = jax.random.uniform(k_img2, (B, 1, H2, W2), dtype=jnp.float32) + 0.5
    out2 = mynet_forward(c1, event2, img2)
    jax.block_until_ready(out2)
    assert out2.shape == (B, 1, H2, W2)
    assert jnp.allclose(out2, mynet_reference(c1, event2, img2), atol=5e-3, rtol=5e-3)

    print("KERNEL_OK")
</pallas_src>

<mosaic_0001>
module attributes {stable_mosaic.version = 11 : i64} {
  func.func @mynet_kernel(%arg0: i32, %arg1: i32, %arg2: memref<1xf32, #tpu.memory_space<smem>>, %arg3: memref<1x12x8x128xf32, #tpu.memory_space<vmem>>, %arg4: memref<1x8x128xf32, #tpu.memory_space<vmem>>, %arg5: memref<1x8x128xf32, #tpu.memory_space<vmem>>) attributes {dimension_semantics = [#tpu.dimension_semantics<parallel>, #tpu.dimension_semantics<parallel>], iteration_bounds = array<i64: 2, 2>, scalar_prefetch = 0 : i64, scratch_operands = 0 : i64, tpu.core_type = #tpu.core_type<tc>, window_params = [{transform_indices = @transform_0, window_bounds = array<i64: 1>}, {transform_indices = @transform_1, window_bounds = array<i64: 1, 12, 8, 128>}, {transform_indices = @transform_2, window_bounds = array<i64: 1, 8, 128>}, {transform_indices = @transform_3, window_bounds = array<i64: 1, 8, 128>}]} {
    %c0 = arith.constant 0 : index
    %0 = memref.load %arg2[%c0] : memref<1xf32, #tpu.memory_space<smem>>
    %cst = arith.constant 0.000000e+00 : f32
    %1 = arith.subf %cst, %0 : f32
    %c0_0 = arith.constant 0 : index
    %c5 = arith.constant 5 : index
    %c0_1 = arith.constant 0 : index
    %c0_2 = arith.constant 0 : index
    %2 = vector.load %arg3[%c0_0, %c5, %c0_1, %c0_2] : memref<1x12x8x128xf32, #tpu.memory_space<vmem>>, vector<1x1x8x128xf32>
    %3 = vector.shape_cast %2 : vector<1x1x8x128xf32> to vector<8x128xf32>
    %4 = vector.broadcast %1 : f32 to vector<8x128xf32>
    %5 = arith.mulf %4, %3 : vector<8x128xf32>
    %6 = math.exp %5 : vector<8x128xf32>
    %c0_3 = arith.constant 0 : index
    %c4 = arith.constant 4 : index
    %c0_4 = arith.constant 0 : index
    %c0_5 = arith.constant 0 : index
    %7 = vector.load %arg3[%c0_3, %c4, %c0_4, %c0_5] : memref<1x12x8x128xf32, #tpu.memory_space<vmem>>, vector<1x1x8x128xf32>
    %8 = vector.shape_cast %7 : vector<1x1x8x128xf32> to vector<8x128xf32>
    %9 = arith.addf %3, %8 : vector<8x128xf32>
    %10 = vector.broadcast %1 : f32 to vector<8x128xf32>
    %11 = arith.mulf %10, %9 : vector<8x128xf32>
    %12 = math.exp %11 : vector<8x128xf32>
    %13 = arith.addf %6, %12 : vector<8x128xf32>
    %c0_6 = arith.constant 0 : index
    %c3 = arith.constant 3 : index
    %c0_7 = arith.constant 0 : index
    %c0_8 = arith.constant 0 : index
    %14 = vector.load %arg3[%c0_6, %c3, %c0_7, %c0_8] : memref<1x12x8x128xf32, #tpu.memory_space<vmem>>, vector<1x1x8x128xf32>
    %15 = vector.shape_cast %14 : vector<1x1x8x128xf32> to vector<8x128xf32>
    %16 = arith.addf %9, %15 : vector<8x128xf32>
    %17 = vector.broadcast %1 : f32 to vector<8x128xf32>
    %18 = arith.mulf %17, %16 : vector<8x128xf32>
    %19 = math.exp %18 : vector<8x128xf32>
    %20 = arith.addf %13, %19 : vector<8x128xf32>
    %c0_9 = arith.constant 0 : index
    %c2 = arith.constant 2 : index
    %c0_10 = arith.constant 0 : index
    %c0_11 = arith.constant 0 : index
    %21 = vector.load %arg3[%c0_9, %c2, %c0_10, %c0_11] : memref<1x12x8x128xf32, #tpu.memory_space<vmem>>, vector<1x1x8x128xf32>
    %22 = vector.shape_cast %21 : vector<1x1x8x128xf32> to vector<8x128xf32>
    %23 = arith.addf %16, %22 : vector<8x128xf32>
    %24 = vector.broadcast %1 : f32 to vector<8x128xf32>
    %25 = arith.mulf %24, %23 : vector<8x128xf32>
    %26 = math.exp %25 : vector<8x128xf32>
    %27 = arith.addf %20, %26 : vector<8x128xf32>
    %c0_12 = arith.constant 0 : index
    %c1 = arith.constant 1 : index
    %c0_13 = arith.constant 0 : index
    %c0_14 = arith.constant 0 : index
    %28 = vector.load %arg3[%c0_12, %c1, %c0_13, %c0_14] : memref<1x12x8x128xf32, #tpu.memory_space<vmem>>, vector<1x1x8x128xf32>
    %29 = vector.shape_cast %28 : vector<1x1x8x128xf32> to vector<8x128xf32>
    %30 = arith.addf %23, %29 : vector<8x128xf32>
    %31 = vector.broadcast %1 : f32 to vector<8x128xf32>
    %32 = arith.mulf %31, %30 : vector<8x128xf32>
    %33 = math.exp %32 : vector<8x128xf32>
    %34 = arith.addf %27, %33 : vector<8x128xf32>
    %c0_15 = arith.constant 0 : index
    %c0_16 = arith.constant 0 : index
    %c0_17 = arith.constant 0 : index
    %c0_18 = arith.constant 0 : index
    %35 = vector.load %arg3[%c0_15, %c0_16, %c0_17, %c0_18] : memref<1x12x8x128xf32, #tpu.memory_space<vmem>>, vector<1x1x8x128xf32>
    %36 = vector.shape_cast %35 : vector<1x1x8x128xf32> to vector<8x128xf32>
    %37 = arith.addf %30, %36 : vector<8x128xf32>
    %38 = vector.broadcast %1 : f32 to vector<8x128xf32>
    %39 = arith.mulf %38, %37 : vector<8x128xf32>
    %40 = math.exp %39 : vector<8x128xf32>
    %41 = arith.addf %34, %40 : vector<8x128xf32>
    %c0_19 = arith.constant 0 : index
    %c6 = arith.constant 6 : index
    %c0_20 = arith.constant 0 : index
    %c0_21 = arith.constant 0 : index
    %42 = vector.load %arg3[%c0_19, %c6, %c0_20, %c0_21] : memref<1x12x8x128xf32, #tpu.memory_space<vmem>>, vector<1x1x8x128xf32>
    %43 = vector.shape_cast %42 : vector<1x1x8x128xf32> to vector<8x128xf32>
    %44 = vector.broadcast %0 : f32 to vector<8x128xf32>
    %45 = arith.mulf %44, %43 : vector<8x128xf32>
    %46 = math.exp %45 : vector<8x128xf32>
    %c0_22 = arith.constant 0 : index
    %c7 = arith.constant 7 : index
    %c0_23 = arith.constant 0 : index
    %c0_24 = arith.constant 0 : index
    %47 = vector.load %arg3[%c0_22, %c7, %c0_23, %c0_24] : memref<1x12x8x128xf32, #tpu.memory_space<vmem>>, vector<1x1x8x128xf32>
    %48 = vector.shape_cast %47 : vector<1x1x8x128xf32> to vector<8x128xf32>
    %49 = arith.addf %43, %48 : vector<8x128xf32>
    %50 = vector.broadcast %0 : f32 to vector<8x128xf32>
    %51 = arith.mulf %50, %49 : vector<8x128xf32>
    %52 = math.exp %51 : vector<8x128xf32>
    %53 = arith.addf %46, %52 : vector<8x128xf32>
    %c0_25 = arith.constant 0 : index
    %c8 = arith.constant 8 : index
    %c0_26 = arith.constant 0 : index
    %c0_27 = arith.constant 0 : index
    %54 = vector.load %arg3[%c0_25, %c8, %c0_26, %c0_27] : memref<1x12x8x128xf32, #tpu.memory_space<vmem>>, vector<1x1x8x128xf32>
    %55 = vector.shape_cast %54 : vector<1x1x8x128xf32> to vector<8x128xf32>
    %56 = arith.addf %49, %55 : vector<8x128xf32>
    %57 = vector.broadcast %0 : f32 to vector<8x128xf32>
    %58 = arith.mulf %57, %56 : vector<8x128xf32>
    %59 = math.exp %58 : vector<8x128xf32>
    %60 = arith.addf %53, %59 : vector<8x128xf32>
    %c0_28 = arith.constant 0 : index
    %c9 = arith.constant 9 : index
    %c0_29 = arith.constant 0 : index
    %c0_30 = arith.constant 0 : index
    %61 = vector.load %arg3[%c0_28, %c9, %c0_29, %c0_30] : memref<1x12x8x128xf32, #tpu.memory_space<vmem>>, vector<1x1x8x128xf32>
    %62 = vector.shape_cast %61 : vector<1x1x8x128xf32> to vector<8x128xf32>
    %63 = arith.addf %56, %62 : vector<8x128xf32>
    %64 = vector.broadcast %0 : f32 to vector<8x128xf32>
    %65 = arith.mulf %64, %63 : vector<8x128xf32>
    %66 = math.exp %65 : vector<8x128xf32>
    %67 = arith.addf %60, %66 : vector<8x128xf32>
    %c0_31 = arith.constant 0 : index
    %c10 = arith.constant 10 : index
    %c0_32 = arith.constant 0 : index
    %c0_33 = arith.constant 0 : index
    %68 = vector.load %arg3[%c0_31, %c10, %c0_32, %c0_33] : memref<1x12x8x128xf32, #tpu.memory_space<vmem>>, vector<1x1x8x128xf32>
    %69 = vector.shape_cast %68 : vector<1x1x8x128xf32> to vector<8x128xf32>
    %70 = arith.addf %63, %69 : vector<8x128xf32>
    %71 = vector.broadcast %0 : f32 to vector<8x128xf32>
    %72 = arith.mulf %71, %70 : vector<8x128xf32>
    %73 = math.exp %72 : vector<8x128xf32>
    %74 = arith.addf %67, %73 : vector<8x128xf32>
    %c0_34 = arith.constant 0 : index
    %c11 = arith.constant 11 : index
    %c0_35 = arith.constant 0 : index
    %c0_36 = arith.constant 0 : index
    %75 = vector.load %arg3[%c0_34, %c11, %c0_35, %c0_36] : memref<1x12x8x128xf32, #tpu.memory_space<vmem>>, vector<1x1x8x128xf32>
    %76 = vector.shape_cast %75 : vector<1x1x8x128xf32> to vector<8x128xf32>
    %77 = arith.addf %70, %76 : vector<8x128xf32>
    %78 = vector.broadcast %0 : f32 to vector<8x128xf32>
    %79 = arith.mulf %78, %77 : vector<8x128xf32>
    %80 = math.exp %79 : vector<8x128xf32>
    %81 = arith.addf %74, %80 : vector<8x128xf32>
    %82 = arith.addf %41, %81 : vector<8x128xf32>
    %c0_37 = arith.constant 0 : index
    %c0_38 = arith.constant 0 : index
    %c0_39 = arith.constant 0 : index
    %83 = vector.load %arg4[%c0_37, %c0_38, %c0_39] : memref<1x8x128xf32, #tpu.memory_space<vmem>>, vector<1x8x128xf32>
    %84 = vector.shape_cast %83 : vector<1x8x128xf32> to vector<8x128xf32>
    %85 = tpu.reciprocal %82 {approx = true} : vector<8x128xf32> -> vector<8x128xf32>
    %cst_40 = arith.constant 1.200000e+01 : f32
    %86 = vector.broadcast %cst_40 : f32 to vector<8x128xf32>
    %87 = arith.mulf %86, %85 : vector<8x128xf32>
    %88 = arith.mulf %84, %87 : vector<8x128xf32>
    %c0_41 = arith.constant 0 : index
    %c0_42 = arith.constant 0 : index
    %c0_43 = arith.constant 0 : index
    %89 = vector.load %arg5[%c0_41, %c0_42, %c0_43] : memref<1x8x128xf32, #tpu.memory_space<vmem>>, vector<1x8x128xf32>
    %90 = vector.shape_cast %89 : vector<1x8x128xf32> to vector<8x128xf32>
    %91 = vector.shape_cast %88 : vector<8x128xf32> to vector<1x8x128xf32>
    tpu.vector_store %arg5[%c0_41, %c0_42, %c0_43], %91 {strides = array<i32>} : memref<1x8x128xf32, #tpu.memory_space<vmem>>, vector<1x8x128xf32>,
    return
  }
  func.func @transform_0(%arg0: i32, %arg1: i32) -> i32 {
    %c0_i32 = arith.constant 0 : i32
    %c0_i32_0 = arith.constant 0 : i32
    return %c0_i32 : i32
  }
  func.func @transform_1(%arg0: i32, %arg1: i32) -> (i32, i32, i32, i32) {
    %c0_i32 = arith.constant 0 : i32
    %c0_i32_0 = arith.constant 0 : i32
    %c0_i32_1 = arith.constant 0 : i32
    return %arg0, %c0_i32, %arg1, %c0_i32_0 : i32, i32, i32, i32
  }
  func.func @transform_2(%arg0: i32, %arg1: i32) -> (i32, i32, i32) {
    %c0_i32 = arith.constant 0 : i32
    %c0_i32_0 = arith.constant 0 : i32
    return %arg0, %arg1, %c0_i32 : i32, i32, i32
  }
  func.func @transform_3(%arg0: i32, %arg1: i32) -> (i32, i32, i32) {
    %c0_i32 = arith.constant 0 : i32
    %c0_i32_0 = arith.constant 0 : i32
    return %arg0, %arg1, %c0_i32 : i32, i32, i32
  }
}

</mosaic_0001>

<llo_original>
// kernel: tpu_custom_call.1
$region0: #{tpu_custom_call.1}
  #allocation0 [shape = 'u32[]', space=smem, size = 0x4, offset = 0x4, fixed_abs, tag = 'smem constant byte address 0x4 - core index']
  #allocation1 [shape = 'u32[144,128]{1,0:T(1,128)}', space=vmem, size = 0x12000, scoped, tag = 'internal scratch']
  #allocation2 [shape = 'f32[1]{0:T(128)S(6)}', space=smem, size = 0x200, scoped, tag = 'scoped memory for tpu_custom_call.1']
  %s0 = inlined_call_operand.<no memory space> [shape: f32[1], index: 0, kind: input, shape index: {}]
  %s1 = inlined_call_operand.hbm [shape: f32[2,12,16,128], index: 1, kind: input, shape index: {}]
  %s2 = inlined_call_operand.hbm [shape: f32[2,16,128], index: 2, kind: input, shape index: {}]
  %s3 = inlined_call_operand.hbm [shape: f32[2,16,128], index: 3, kind: output, shape index: {}]
  %s4 = sld [smem:[#allocation0]]
  $region53: #{tpu_custom_call.1} parent=0
    _
  %s6 = ssub.s32 1, %s4
  %s7 = scalar_select 0, %s6, %s4
  %8 = sst [smem:[#allocation2]] %s0
  $region1: #{tpu_custom_call.1} parent=0
    #allocation3 [shape = 'u8[98304]{0}', space=vmem, size = 0x18000, scoped, tag = 'input window, operand 1']
    #allocation4 [shape = 's32[2]{0}', space=sflag, size = 0x8, scoped, tag = 'scoped memory for tpu_custom_call.1']
    #allocation5 [shape = 's32[2]{0}', space=sflag, size = 0x8, scoped, tag = 'scoped memory for tpu_custom_call.1']
    #allocation6 [shape = 'u8[8192]{0}', space=vmem, size = 0x2000, scoped, tag = 'input window, operand 2']
    #allocation7 [shape = 's32[2]{0}', space=sflag, size = 0x8, scoped, tag = 'scoped memory for tpu_custom_call.1']
    #allocation8 [shape = 'u8[8192]{0}', space=vmem, size = 0x2000, scoped, tag = 'output window, operand 0']
    %9 = vsyncpa [#allocation4], 0
    %s10 = scalar_lea.sflag [#allocation4], 1
    %11 = vsyncpa %s10, 0
    %12 = vsyncpa [#allocation7], 0
    %s13 = scalar_lea.sflag [#allocation7], 1
    %14 = vsyncpa %s13, 0
    %15 = vsyncpa [#allocation5], 0
    %s16 = scalar_lea.sflag [#allocation5], 1
    %17 = vsyncpa %s16, 0
    loop: start=0, step=1, limit=6
    $region2: #{tpu_custom_call.1} parent=1 // loop_pre_header
      _
    $region3: #{tpu_custom_call.1} parent=1 // loop_header
      %s19 = sphi 0, %s23
      %p20 = scmp.ge.s32.totalorder %s19, 6
      %s26 = sphi 0, %s38
      %s27 = sphi 0, %s34
      %s28 = sphi 0, %s26
      %s29 = sphi 0, %s27
      %s30 = sphi 0, %s28
      %s31 = sphi 0, %s29
      %s39 = sphi 0, %s39
      %s41 = sphi 0, %s39
      %s42 = sphi 0, %s41
      %s56 = sphi 0, %s42
      %s64 = sphi 0, %s66
      %s67 = sphi 0, %s64
      %s68 = sphi 0, %s67
      %s84 = sphi 0, %s68
      %s92 = sphi 0, %s94
      %s95 = sphi 0, %s92
      %s96 = sphi 0, %s95
      %s112 = sphi 0, %s96
      %s120 = sphi 0, %s122
      %s123 = sphi 0, %s120
      %s124 = sphi 0, %s123
      %s140 = sphi 0, %s124
    $region4: #{tpu_custom_call.1} parent=1 // loop_header_branch
      %22 = sbr.rel (%p20) target = $region8
    $region5: #{tpu_custom_call.1} parent=1 // loop_body
      %s24 = ssub.s32 %s19, 1
      %s25 = ssub.s32 %s19, 2
      %s32 = sadd.s32 1, %s27
      %p33 = scmp.ge.s32.totalorder %s32, 2
      %s34 = scalar_select %p33, 0, %s32
      %s35 = sadd.s32 1, %s26
      %s36 = scalar_select %p33, %s35, %s26
      %p37 = scmp.ge.s32.totalorder %s36, 2
      %s38 = scalar_select %p37, 0, %s36
      %s40 = sadd.s32 %s39, 1
      %p43 = scmp.eq.s32.totalorder %s19, 3
      %p44 = scmp.ne.s32.totalorder %s39, %s41
      %p45 = scmp.eq.s32.totalorder %s19, 0
      %p46 = por %p44, %p45
      %p47 = scmp.ne.s32.totalorder %s39, %s41
      %p48 = scmp.eq.s32.totalorder %s24, 3
      %p49 = por %p47, %p48
      %p50 = scmp.ne.s32.totalorder %s41, %s42
      %p51 = scmp.eq.s32.totalorder %s24, 0
      %p52 = por %p50, %p51
      %p53 = scmp.ne.s32.totalorder %s41, %s42
      %p54 = scmp.eq.s32.totalorder %s25, 3
      %p55 = por %p53, %p54
      %p57 = scmp.ne.s32.totalorder %s42, %s56
      %p58 = scmp.eq.s32.totalorder %s25, 0
      %p59 = por %p57, %p58
      %s60 = ssub.s32 %s26, %s38
      %s61 = ssub.s32 %s27, %s34
      %s62 = sor.u32 %s60, %s61
      %p63 = scmp.eq.s32.totalorder %s62, 0
      %s65 = sadd.s32 %s64, 1
      %s66 = scalar_select %p63, %s64, %s65
      %p69 = pneg %p63
      %p70 = scmp.eq.s32.totalorder %s19, 3
      %p71 = por %p69, %p70
      %p72 = scmp.ne.s32.totalorder %s64, %s67
      %p73 = scmp.eq.s32.totalorder %s19, 0
      %p74 = por %p72, %p73
      %p75 = scmp.ne.s32.totalorder %s64, %s67
      %p76 = scmp.eq.s32.totalorder %s24, 3
      %p77 = por %p75, %p76
      %p78 = scmp.ne.s32.totalorder %s67, %s68
      %p79 = scmp.eq.s32.totalorder %s24, 0
      %p80 = por %p78, %p79
      %p81 = scmp.ne.s32.totalorder %s67, %s68
      %p82 = scmp.eq.s32.totalorder %s25, 3
      %p83 = por %p81, %p82
      %p85 = scmp.ne.s32.totalorder %s68, %s84
      %p86 = scmp.eq.s32.totalorder %s25, 0
      %p87 = por %p85, %p86
      %s88 = ssub.s32 %s26, %s38
      %s89 = ssub.s32 %s27, %s34
      %s90 = sor.u32 %s88, %s89
      %p91 = scmp.eq.s32.totalorder %s90, 0
      %s93 = sadd.s32 %s92, 1
      %s94 = scalar_select %p91, %s92, %s93
      %p97 = pneg %p91
      %p98 = scmp.eq.s32.totalorder %s19, 3
      %p99 = por %p97, %p98
      %p100 = scmp.ne.s32.totalorder %s92, %s95
      %p101 = scmp.eq.s32.totalorder %s19, 0
      %p102 = por %p100, %p101
      %p103 = scmp.ne.s32.totalorder %s92, %s95
      %p104 = scmp.eq.s32.totalorder %s24, 3
      %p105 = por %p103, %p104
      %p106 = scmp.ne.s32.totalorder %s95, %s96
      %p107 = scmp.eq.s32.totalorder %s24, 0
      %p108 = por %p106, %p107
      %p109 = scmp.ne.s32.totalorder %s95, %s96
      %p110 = scmp.eq.s32.totalorder %s25, 3
      %p111 = por %p109, %p110
      %p113 = scmp.ne.s32.totalorder %s96, %s112
      %p114 = scmp.eq.s32.totalorder %s25, 0
      %p115 = por %p113, %p114
      %s116 = ssub.s32 %s26, %s38
      %s117 = ssub.s32 %s27, %s34
      %s118 = sor.u32 %s116, %s117
      %p119 = scmp.eq.s32.totalorder %s118, 0
      %s121 = sadd.s32 %s120, 1
      %s122 = scalar_select %p119, %s120, %s121
      %p125 = pneg %p119
      %p126 = scmp.eq.s32.totalorder %s19, 3
      %p127 = por %p125, %p126
      %p128 = scmp.ne.s32.totalorder %s120, %s123
      %p129 = scmp.eq.s32.totalorder %s19, 0
      %p130 = por %p128, %p129
      %p131 = scmp.ne.s32.totalorder %s120, %s123
      %p132 = scmp.eq.s32.totalorder %s24, 3
      %p133 = por %p131, %p132
      %p134 = scmp.ne.s32.totalorder %s123, %s124
      %p135 = scmp.eq.s32.totalorder %s24, 0
      %p136 = por %p134, %p135
      %p137 = scmp.ne.s32.totalorder %s123, %s124
      %p138 = scmp.eq.s32.totalorder %s25, 3
      %p139 = por %p137, %p138
      %p141 = scmp.ne.s32.totalorder %s124, %s140
      %p142 = scmp.eq.s32.totalorder %s25, 0
      %p143 = por %p141, %p142
      %p144 = scmp.le.s32.totalorder 1, %s19
      %p145 = scmp.lt.s32.totalorder %s19, 5
      %p146 = pnand %p144, %p145
      %p147 = pneg %p146
      // Predicated region
      $region9: #{tpu_custom_call.1} parent=5 // pred_check
        _
      $region10: #{tpu_custom_call.1} parent=5 // pred_check_branch
        %149 = sbr.rel (%p146) target = $region12
      $region11: #{tpu_custom_call.1} parent=5 // pred_region
        %s150 = ssub.s32 %s19, 1
        // Predicated region
        $region13: #{tpu_custom_call.1} parent=11 // pred_check
          %p151 = pneg %p52
        $region14: #{tpu_custom_call.1} parent=11 // pred_check_branch
          %153 = sbr.rel (%p151) target = $region16
        $region15: #{tpu_custom_call.1} parent=11 // pred_region
          _
        $region16: #{tpu_custom_call.1} parent=11 // pred_fallthru
          _
      $region12: #{tpu_custom_call.1} parent=5 // pred_fallthru
        _
      %p154 = scmp.lt.s32.totalorder %s19, 4
      // Predicated region
      $region17: #{tpu_custom_call.1} parent=5 // pred_check
        %p155 = pneg %p154
      $region18: #{tpu_custom_call.1} parent=5 // pred_check_branch
        %157 = sbr.rel (%p155) target = $region20
      $region19: #{tpu_custom_call.1} parent=5 // pred_region
        // Predicated region
        $region21: #{tpu_custom_call.1} parent=19 // pred_check
          %p158 = pneg %p74
        $region22: #{tpu_custom_call.1} parent=19 // pred_check_branch
          %160 = sbr.rel (%p158) target = $region24
        $region23: #{tpu_custom_call.1} parent=19 // pred_region
          %s161 = sand.u32 %s64, 1
          %s162 = scalar_lea.sflag [#allocation4], %s161
          %s163 = sand.u32 %s64, 1
          %s164 = smul.addr %s163, 96
          %s165 = scalar_lea.vmem [#allocation3], %s164
          %s167 = ssub.s32 1536, 1536
          %168 = vsyncadd %s162, %s167
          %s169 = smul.addr %s26, 24
          %s170 = sadd.s32 %s27, %s169
          %s171 = smul.addr %s170, 128
          %s172 = scalar_lea.hbm %s1, %s171
          %s173 = sshll.u32 %s165, 4
          %s174 = int_to_ptr.vmem [resolvable:$true] %s173
          %179 = dma.hbm_to_vmem [thread:$0]  %s172, 1536, %s174, %s162, 256, 128, 8
        $region24: #{tpu_custom_call.1} parent=19 // pred_fallthru
          _
        // Predicated region
        $region25: #{tpu_custom_call.1} parent=19 // pred_check
          %p180 = pneg %p102
        $region26: #{tpu_custom_call.1} parent=19 // pred_check_branch
          %182 = sbr.rel (%p180) target = $region28
        $region27: #{tpu_custom_call.1} parent=19 // pred_region
          %s183 = sand.u32 %s92, 1
          %s184 = scalar_lea.sflag [#allocation7], %s183
          %s185 = sand.u32 %s92, 1
          %s186 = smul.addr %s185, 8
          %s187 = scalar_lea.vmem [#allocation6], %s186
          %s189 = ssub.s32 128, 128
          %190 = vsyncadd %s184, %s189
          %s191 = smul.addr %s26, 2
          %s192 = sadd.s32 %s27, %s191
          %s193 = smul.addr %s192, 128
          %s194 = scalar_lea.hbm %s2, %s193
          %s196 = sshll.u32 %s187, 4
          %s197 = int_to_ptr.vmem [resolvable:$true] %s196
          %199 = dma.hbm_to_vmem [thread:$0]  %s194, 128, %s197, %s184
        $region28: #{tpu_custom_call.1} parent=19 // pred_fallthru
          _
      $region20: #{tpu_custom_call.1} parent=5 // pred_fallthru
        _
      %p200 = scmp.le.s32.totalorder 1, %s19
      %p201 = scmp.lt.s32.totalorder %s19, 5
      %p202 = pnand %p200, %p201
      %p203 = pneg %p202
      // Predicated region
      $region29: #{tpu_custom_call.1} parent=5 // pred_check
        _
      $region30: #{tpu_custom_call.1} parent=5 // pred_check_branch
        %205 = sbr.rel (%p202) target = $region32
      $region31: #{tpu_custom_call.1} parent=5 // pred_region
        %s206 = ssub.s32 %s19, 1
        %s207 = sand.u32 %s67, 1
        %s208 = scalar_lea.sflag [#allocation4], %s207
        %s209 = sand.u32 %s67, 1
        %s210 = smul.addr %s209, 96
        %s211 = scalar_lea.vmem [#allocation3], %s210
        // Predicated region
        $region33: #{tpu_custom_call.1} parent=31 // pred_check
          %p212 = pneg %p80
        $region34: #{tpu_custom_call.1} parent=31 // pred_check_branch
          %214 = sbr.rel (%p212) target = $region36
        $region35: #{tpu_custom_call.1} parent=31 // pred_region
          %215 = dma.done %s208, 1536
        $region36: #{tpu_custom_call.1} parent=31 // pred_fallthru
          _
        %s216 = sand.u32 %s95, 1
        %s217 = scalar_lea.sflag [#allocation7], %s216
        %s218 = sand.u32 %s95, 1
        %s219 = smul.addr %s218, 8
        %s220 = scalar_lea.vmem [#allocation6], %s219
        // Predicated region
        $region37: #{tpu_custom_call.1} parent=31 // pred_check
          %p221 = pneg %p108
        $region38: #{tpu_custom_call.1} parent=31 // pred_check_branch
          %223 = sbr.rel (%p221) target = $region40
        $region39: #{tpu_custom_call.1} parent=31 // pred_region
          %224 = dma.done %s217, 128
        $region40: #{tpu_custom_call.1} parent=31 // pred_fallthru
          _
        %p225 = pneg %p52
        %p226 = pneg %p49
        %s227 = sand.u32 %s67, 1
        %s228 = scalar_lea.sflag [#allocation4], %s227
        %s229 = sand.u32 %s67, 1
        %s230 = smul.addr %s229, 96
        %s231 = scalar_lea.vmem [#allocation3], %s230
        %p232 = pneg %p80
        %p233 = pneg %p77
        %s234 = sand.u32 %s95, 1
        %s235 = scalar_lea.sflag [#allocation7], %s234
        %s236 = sand.u32 %s95, 1
        %s237 = smul.addr %s236, 8
        %s238 = scalar_lea.vmem [#allocation6], %s237
        %p239 = pneg %p108
        %p240 = pneg %p105
        %p241 = pneg %p136
        %p242 = pneg %p133
        %s243 = sand.u32 %s123, 1
        %s244 = scalar_lea.sflag [#allocation5], %s243
        %s245 = sand.u32 %s123, 1
        %s246 = smul.addr %s245, 8
        %s247 = scalar_lea.vmem [#allocation8], %s246
        %s248 = sld [smem:[#allocation2]]
        %s249 = ssub.f32 0.0, %s248
        %s250 = scalar_lea.vmem %s211, 40 [#allocation3]
        %v251 = vld [vmem:[%s250] sm:$0xff]
        %v252 = vstv %s249
        %v253 = vmul.f32 %v252, %v251
        %v254 = vmul.f32 %v253, 1.442695
        %v255 = vpow.pop %v254
        %s256 = scalar_lea.vmem %s211, 32 [#allocation3]
        %v257 = vld [vmem:[%s256] sm:$0xff]
        %v258 = vadd.f32 %v251, %v257
        %v259 = vmul.f32 %v252, %v258
        %v260 = vmul.f32 %v259, 1.442695
        %v261 = vpow.pop %v260
        %v262 = vadd.f32 %v255, %v261
        %s263 = scalar_lea.vmem %s211, 24 [#allocation3]
        %v264 = vld [vmem:[%s263] sm:$0xff]
        %v265 = vadd.f32 %v258, %v264
        %v266 = vmul.f32 %v252, %v265
        %v267 = vmul.f32 %v266, 1.442695
        %v268 = vpow.pop %v267
        %v269 = vadd.f32 %v262, %v268
        %s270 = scalar_lea.vmem %s211, 16 [#allocation3]
        %v271 = vld [vmem:[%s270] sm:$0xff]
        %v272 = vadd.f32 %v265, %v271
        %v273 = vmul.f32 %v252, %v272
        %v274 = vmul.f32 %v273, 1.442695
        %v275 = vpow.pop %v274
        %v276 = vadd.f32 %v269, %v275
        %s277 = scalar_lea.vmem %s211, 8 [#allocation3]
        %v278 = vld [vmem:[%s277] sm:$0xff]
        %v279 = vadd.f32 %v272, %v278
        %v280 = vmul.f32 %v252, %v279
        %v281 = vmul.f32 %v280, 1.442695
        %v282 = vpow.pop %v281
        %v283 = vadd.f32 %v276, %v282
        %v284 = vld [vmem:[%s211] sm:$0xff]
        %v285 = vadd.f32 %v279, %v284
        %v286 = vmul.f32 %v252, %v285
        %v287 = vmul.f32 %v286, 1.442695
        %v288 = vpow.pop %v287
        %v289 = vadd.f32 %v283, %v288
        %s290 = scalar_lea.vmem %s211, 48 [#allocation3]
        %v291 = vld [vmem:[%s290] sm:$0xff]
        %v292 = vstv %s248
        %v293 = vmul.f32 %v292, %v291
        %v294 = vmul.f32 %v293, 1.442695
        %v295 = vpow.pop %v294
        %s296 = scalar_lea.vmem %s211, 56 [#allocation3]
        %v297 = vld [vmem:[%s296] sm:$0xff]
        %v298 = vadd.f32 %v291, %v297
        %v299 = vmul.f32 %v292, %v298
        %v300 = vmul.f32 %v299, 1.442695
        %v301 = vpow.pop %v300
        %v302 = vadd.f32 %v295, %v301
        %s303 = scalar_lea.vmem %s211, 64 [#allocation3]
        %v304 = vld [vmem:[%s303] sm:$0xff]
        %v305 = vadd.f32 %v298, %v304
        %v306 = vmul.f32 %v292, %v305
        %v307 = vmul.f32 %v306, 1.442695
        %v308 = vpow.pop %v307
        %v309 = vadd.f32 %v302, %v308
        %s310 = scalar_lea.vmem %s211, 72 [#allocation3]
        %v311 = vld [vmem:[%s310] sm:$0xff]
        %v312 = vadd.f32 %v305, %v311
        %v313 = vmul.f32 %v292, %v312
        %v314 = vmul.f32 %v313, 1.442695
        %v315 = vpow.pop %v314
        %v316 = vadd.f32 %v309, %v315
        %s317 = scalar_lea.vmem %s211, 80 [#allocation3]
        %v318 = vld [vmem:[%s317] sm:$0xff]
        %v319 = vadd.f32 %v312, %v318
        %v320 = vmul.f32 %v292, %v319
        %v321 = vmul.f32 %v320, 1.442695
        %v322 = vpow.pop %v321
        %v323 = vadd.f32 %v316, %v322
        %s324 = scalar_lea.vmem %s211, 88 [#allocation3]
        %v325 = vld [vmem:[%s324] sm:$0xff]
        %v326 = vadd.f32 %v319, %v325
        %v327 = vmul.f32 %v292, %v326
        %v328 = vmul.f32 %v327, 1.442695
        %v329 = vpow.pop %v328
        %v330 = vadd.f32 %v323, %v329
        %v331 = vadd.f32 %v289, %v330
        %v332 = vld [vmem:[%s220] sm:$0xff]
        %v333 = vrcp.pop %v331
        %v334 = vmul.f32 %v333, 12.0
        %v335 = vmul.f32 %v332, %v334
        %336 = vst [vmem:[%s247] sm:$0xff] %v335
        %s337 = sand.u32 %s123, 1
        %s338 = scalar_lea.sflag [#allocation5], %s337
        %s339 = sand.u32 %s123, 1
        %s340 = smul.addr %s339, 8
        %s341 = scalar_lea.vmem [#allocation8], %s340
        // Predicated region
        $region41: #{tpu_custom_call.1} parent=31 // pred_check
          %p342 = pneg %p133
        $region42: #{tpu_custom_call.1} parent=31 // pred_check_branch
          %344 = sbr.rel (%p342) target = $region44
        $region43: #{tpu_custom_call.1} parent=31 // pred_region
          %s346 = ssub.s32 128, 128
          %347 = vsyncadd %s338, %s346
          %s348 = smul.addr %s28, 2
          %s349 = sadd.s32 %s29, %s348
          %s350 = smul.addr %s349, 128
          %s351 = scalar_lea.hbm %s3, %s350
          %s353 = sshll.u32 %s341, 4
          %s354 = int_to_ptr.vmem [resolvable:$true] %s353
          %356 = dma.vmem_to_hbm [thread:$0]  %s354, 128, %s351, %s338
        $region44: #{tpu_custom_call.1} parent=31 // pred_fallthru
          _
      $region32: #{tpu_custom_call.1} parent=5 // pred_fallthru
        _
      %p357 = scmp.le.s32.totalorder 2, %s19
      // Predicated region
      $region45: #{tpu_custom_call.1} parent=5 // pred_check
        %p358 = pneg %p357
      $region46: #{tpu_custom_call.1} parent=5 // pred_check_branch
        %360 = sbr.rel (%p358) target = $region48
      $region47: #{tpu_custom_call.1} parent=5 // pred_region
        %s361 = ssub.s32 %s19, 2
        // Predicated region
        $region49: #{tpu_custom_call.1} parent=47 // pred_check
          %p362 = pneg %p139
        $region50: #{tpu_custom_call.1} parent=47 // pred_check_branch
          %364 = sbr.rel (%p362) target = $region52
        $region51: #{tpu_custom_call.1} parent=47 // pred_region
          %s365 = sand.u32 %s124, 1
          %s366 = scalar_lea.sflag [#allocation5], %s365
          %s367 = sand.u32 %s124, 1
          %s368 = smul.addr %s367, 8
          %s369 = scalar_lea.vmem [#allocation8], %s368
          %370 = dma.done %s366, 128
        $region52: #{tpu_custom_call.1} parent=47 // pred_fallthru
          _
      $region48: #{tpu_custom_call.1} parent=5 // pred_fallthru
        _
    $region6: #{tpu_custom_call.1} parent=1 // loop_footer
      %s23 = sadd.s32 1, %s19
    $region7: #{tpu_custom_call.1} parent=1 // loop_footer_branch
      %18 = sbr.rel target = $region3
    $region8: #{tpu_custom_call.1} parent=1 // loop_exit
      _
    %371 = vsyncpa [#allocation4], 1
    %s372 = scalar_lea.sflag [#allocation4], 1
    %373 = vsyncpa %s372, 1
    %374 = vsyncpa [#allocation7], 1
    %s375 = scalar_lea.sflag [#allocation7], 1
    %376 = vsyncpa %s375, 1
    %377 = vsyncpa [#allocation5], 1
    %s378 = scalar_lea.sflag [#allocation5], 1
    %379 = vsyncpa %s378, 1

</llo_original>
